<compile_context>
chip_gen: v7x
topology: tpu7x:2x2x1
jax: 0.10.0
libtpu: 0.0.40
codegen_flags: <defaults>
</compile_context>

<pallas_src>
import functools

import jax
import jax.numpy as jnp
from jax.experimental import pallas as pl
from jax.experimental.pallas import tpu as pltpu


def _round_up(x, m):
    return (x + m - 1) // m * m


def qwen2_mlp_kernel(x_ref, wgu_ref, wd_ref, sgu_ref, sd_ref, o_ref, acc_ref):
    """One (row tile, intermediate chunk) step of the fused SwiGLU MLP.

    x_ref  : (tm, H)       input activations row tile (compute dtype)
    wgu_ref: (H, 2*ti)     fused [gate_k | up_k] weight chunk (storage dtype)
    wd_ref : (ti, H)       down_proj weight chunk (storage dtype)
    sgu_ref: (1, 2*ti) f32 per-output-column dequant scale (ones if unquantized)
    sd_ref : (1, H)    f32 per-output-column dequant scale for down_proj
    o_ref  : (tm, H)       output row tile (written on last k)
    acc_ref: (tm, H) f32   VMEM accumulator across intermediate chunks
    """
    k = pl.program_id(1)

    @pl.when(k == 0)
    def _init():
        acc_ref[...] = jnp.zeros_like(acc_ref)

    ti = wd_ref.shape[0]
    x = x_ref[...]

    # Fused [gate | up] matmul on the MXU. Weights may be a narrow storage
    # dtype (e.g. int8) — cast to the activation dtype; accumulate in f32.
    w_gu = wgu_ref[...].astype(x.dtype)
    gu = jnp.dot(x, w_gu, preferred_element_type=jnp.float32)
    gu = gu * sgu_ref[...]          # dequant (or identity) scale, broadcast

    g = gu[:, :ti]
    u = gu[:, ti:]
    h = (g * jax.nn.sigmoid(g)) * u  # SiLU gating in f32

    # Partial down projection for this intermediate chunk.
    w_d = wd_ref[...].astype(x.dtype)
    acc_ref[...] += jnp.dot(h.astype(x.dtype), w_d,
                            preferred_element_type=jnp.float32)

    @pl.when(k == pl.num_programs(1) - 1)
    def _store():
        o_ref[...] = (acc_ref[...] * sd_ref[...]).astype(o_ref.dtype)


def prepare_qwen2_mlp_weights(w_gate, w_up, w_down, *, ti=512,
                              compute_dtype=None, quantize="none"):
    """Convert PyTorch (out_features, in_features) weights into kernel layout.

    Call ONCE at weight-load time. Produces:
      * wgu: (nk, H, 2*ti)  chunk-major fused [gate_k | up_k] blocks — each grid
             step DMAs one fully contiguous chunk,
      * wd : (I_pad, H)     down_proj in (in, out) layout (row chunks contiguous),
      * sgu: (nk, 1, 2*ti)  per-column dequant scales (ones if unquantized),
      * sd : (1, H)         per-column dequant scale for down_proj.

    If ti does not divide intermediate_size, the intermediate dim is padded
    with zero columns/rows (contributes exactly zero to the output).
    Tile guidance for Qwen2.5-7B (I=18944=512*37): ti=512. Spend spare VMEM on
    the row tile tm, not on ti.
    quantize="int8": per-output-channel symmetric int8 weight storage (decode
    bandwidth lever); activations stay bf16, accumulation stays f32.
    """
    I, H = w_gate.shape
    assert w_up.shape == (I, H) and w_down.shape == (H, I)
    ti = min(ti, I)

    wg_t = w_gate.T  # (H, I)
    wu_t = w_up.T    # (H, I)
    wd_t = w_down.T  # (I, H)

    I_pad = _round_up(I, ti)
    if I_pad != I:
        pad = I_pad - I
        wg_t = jnp.pad(wg_t, ((0, 0), (0, pad)))
        wu_t = jnp.pad(wu_t, ((0, 0), (0, pad)))
        wd_t = jnp.pad(wd_t, ((0, pad), (0, 0)))
    nk = I_pad // ti

    # Chunk-major fused gate|up: wgu[k] = [gate_k | up_k], shape (H, 2*ti).
    wgu = jnp.concatenate(
        [wg_t.reshape(H, nk, ti), wu_t.reshape(H, nk, ti)], axis=2)  # (H,nk,2ti)
    wgu = jnp.transpose(wgu, (1, 0, 2))                              # (nk,H,2ti)

    if quantize == "int8":
        s_gu = jnp.maximum(jnp.max(jnp.abs(wgu), axis=1, keepdims=True), 1e-8)
        wgu_q = jnp.clip(jnp.round(wgu / s_gu * 127.0), -127, 127).astype(jnp.int8)
        sgu = (s_gu / 127.0).astype(jnp.float32)                     # (nk,1,2ti)

        s_d = jnp.maximum(jnp.max(jnp.abs(wd_t), axis=0, keepdims=True), 1e-8)
        wd_q = jnp.clip(jnp.round(wd_t / s_d * 127.0), -127, 127).astype(jnp.int8)
        sd = (s_d / 127.0).astype(jnp.float32)                       # (1,H)
        return wgu_q, wd_q, sgu, sd

    if compute_dtype is not None:
        wgu = wgu.astype(compute_dtype)
        wd_t = wd_t.astype(compute_dtype)
    sgu = jnp.ones((nk, 1, 2 * ti), jnp.float32)
    sd = jnp.ones((1, H), jnp.float32)
    return wgu, wd_t, sgu, sd


@functools.partial(jax.jit, static_argnames=("tm", "weight_buffers"))
def qwen2_mlp_forward(hidden_states, wgu, wd, sgu, sd, *, tm=None,
                      weight_buffers=2):
    """hidden_states: (B, S, H); wgu/wd/sgu/sd from prepare_qwen2_mlp_weights.

    tm=None auto-selects the largest row tile that fits device VMEM
    (~1024 on 128 MiB v6e/v5e, ~512 on 64 MiB v7x) and clamps it for small M.
    weight_buffers=3 enables deeper buffering of the weight streams (v5e option
    when the profile shows exposed DMA at k-boundary steps).
    """
    B, S, H = hidden_states.shape
    nk, Hw, two_ti = wgu.shape
    assert Hw == H
    ti = two_ti // 2
    I = wd.shape[0]
    assert I == nk * ti and wd.shape[1] == H
    assert sgu.shape == (nk, 1, 2 * ti) and sd.shape == (1, H)

    out_dtype = hidden_states.dtype
    if jnp.issubdtype(wgu.dtype, jnp.floating):
        compute_dtype = wgu.dtype
    else:
        compute_dtype = jnp.bfloat16   # int8 weights are dequantized in-kernel

    M = B * S
    x = hidden_states.reshape(M, H).astype(compute_dtype)

    c_item = jnp.dtype(compute_dtype).itemsize
    wgu_item = jnp.dtype(wgu.dtype).itemsize
    wd_item = jnp.dtype(wd.dtype).itemsize
    o_item = jnp.dtype(out_dtype).itemsize

    def vmem_estimate(tm_):
        # double-buffered blocks (x, wgu, wd, out, scales) + f32 acc scratch
        # + f32 gate/up intermediates + in-kernel dequant temporaries.
        blocks = 2 * (tm_ * H * c_item + H * 2 * ti * wgu_item
                      + ti * H * wd_item + tm_ * H * o_item
                      + 2 * ti * 4 + H * 4)
        acc = tm_ * H * 4
        interm = 2 * tm_ * 2 * ti * 4
        deq = (H * 2 * ti + ti * H) * c_item if wgu_item < c_item else 0
        return blocks + acc + interm + deq

    try:
        device_vmem = int(pltpu.get_tpu_info().vmem_capacity_bytes)
    except Exception:
        device_vmem = 64 * 1024 * 1024   # conservative (v7x per-core VMEM)

    if tm is None:
        tm = 256
        for cand in (1024, 512, 256):
            if vmem_estimate(cand) <= int(device_vmem * 0.9):
                tm = cand
                break

    # Ragged M: clamp the row tile but never below 16 rows (bf16 sublane
    # packing); pad rows to a multiple of tm and slice the result.
    tm = max(16, _round_up(min(tm, _round_up(M, 16)), 16))
    M_pad = _round_up(M, tm)
    if M_pad != M:
        x = jnp.pad(x, ((0, M_pad - M), (0, 0)))

    vmem_limit = int(min(device_vmem,
                         max(32 * 1024 * 1024, vmem_estimate(tm) * 5 // 4)))

    def wspec(block_shape, index_map):
        if weight_buffers is not None and weight_buffers != 2:
            return pl.BlockSpec(block_shape, index_map,
                                pipeline_mode=pl.Buffered(weight_buffers))
        return pl.BlockSpec(block_shape, index_map)

    out = pl.pallas_call(
        qwen2_mlp_kernel,
        out_shape=jax.ShapeDtypeStruct((M_pad, H), out_dtype),
        grid_spec=pltpu.PrefetchScalarGridSpec(
            num_scalar_prefetch=0,
            grid=(M_pad // tm, nk),
            in_specs=[
                pl.BlockSpec((tm, H), lambda i, k: (i, 0)),            # x rows
                wspec((None, H, 2 * ti), lambda i, k: (k, 0, 0)),      # [g|u] chunk
                wspec((ti, H), lambda i, k: (k, 0)),                   # down chunk
                pl.BlockSpec((None, 1, 2 * ti), lambda i, k: (k, 0, 0)),  # gu scale
                pl.BlockSpec((1, H), lambda i, k: (0, 0)),             # down scale
            ],
            out_specs=pl.BlockSpec((tm, H), lambda i, k: (i, 0)),
            scratch_shapes=[pltpu.VMEM((tm, H), jnp.float32)],
        ),
        compiler_params=pltpu.CompilerParams(
            dimension_semantics=("parallel", "arbitrary"),
            vmem_limit_bytes=vmem_limit,
        ),
    )(x, wgu, wd, sgu, sd)

    return (out[:M].reshape(B, S, H),)


def reference_mlp(hidden_states, w_gate, w_up, w_down):
    """Pure-JAX reference matching the PyTorch forward (f32)."""
    g = hidden_states @ w_gate.T
    u = hidden_states @ w_up.T
    h = (g * jax.nn.sigmoid(g)) * u
    return (h @ w_down.T,)


if __name__ == "__main__":
    # Small config consistent with Qwen2MLP (hidden_act='silu').
    batch, seq = 2, 21           # M = 42: exercises ragged-M padding
    hidden_size = 256
    intermediate_size = 512

    key = jax.random.PRNGKey(0)
    k_x, k_g, k_u, k_d = jax.random.split(key, 4)

    x = jax.random.normal(k_x, (batch, seq, hidden_size), dtype=jnp.float32)
    # PyTorch nn.Linear weight layout: (out_features, in_features), bias=False.
    w_gate = jax.random.normal(k_g, (intermediate_size, hidden_size),
                               dtype=jnp.float32) * 0.02
    w_up = jax.random.normal(k_u, (intermediate_size, hidden_size),
                             dtype=jnp.float32) * 0.02
    w_down = jax.random.normal(k_d, (hidden_size, intermediate_size),
                               dtype=jnp.float32) * 0.02

    (ref,) = reference_mlp(x, w_gate, w_up, w_down)

    # 1) f32 compute path, auto row tile — strict correctness check.
    wgu, wd, sgu, sd = prepare_qwen2_mlp_weights(w_gate, w_up, w_down, ti=256)
    (out,) = qwen2_mlp_forward(x, wgu, wd, sgu, sd)
    out = jax.block_until_ready(out)
    assert out.shape == (batch, seq, hidden_size)
    assert jnp.allclose(out, ref, atol=1e-4, rtol=1e-4), "f32 mismatch vs reference"

    # 2) bf16 compute path with ti that does NOT divide I (exercises I padding).
    wgu_bf, wd_bf, sgu_bf, sd_bf = prepare_qwen2_mlp_weights(
        w_gate, w_up, w_down, ti=192, compute_dtype=jnp.bfloat16)
    (out_bf,) = qwen2_mlp_forward(x, wgu_bf, wd_bf, sgu_bf, sd_bf, tm=32)
    out_bf = jax.block_until_ready(out_bf)
    assert out_bf.shape == (batch, seq, hidden_size)
    assert jnp.allclose(out_bf.astype(jnp.float32), ref, atol=3e-2, rtol=3e-2), \
        "bf16 mismatch vs reference"

    # 3) int8 weight-streaming path (decode bandwidth lever) — loose check.
    wgu_q, wd_q, sgu_q, sd_q = prepare_qwen2_mlp_weights(
        w_gate, w_up, w_down, ti=256, quantize="int8")
    (out_q,) = qwen2_mlp_forward(x, wgu_q, wd_q, sgu_q, sd_q, tm=16)
    out_q = jax.block_until_ready(out_q)
    rel_err = jnp.linalg.norm(out_q.astype(jnp.float32) - ref) / jnp.linalg.norm(ref)
    assert rel_err < 0.05, f"int8 relative error too high: {rel_err}"

    print("KERNEL_OK")
</pallas_src>

<mosaic_0001>
module attributes {stable_mosaic.version = 11 : i64} {
  func.func @qwen2_mlp_kernel(%arg0: i32, %arg1: i32, %arg2: memref<48x256xf32, #tpu.memory_space<vmem>>, %arg3: memref<1x256x512xf32, #tpu.memory_space<vmem>>, %arg4: memref<256x256xf32, #tpu.memory_space<vmem>>, %arg5: memref<1x1x512xf32, #tpu.memory_space<vmem>>, %arg6: memref<1x256xf32, #tpu.memory_space<vmem>>, %arg7: memref<48x256xf32, #tpu.memory_space<vmem>>, %arg8: memref<48x256xf32, #tpu.memory_space<vmem>>) attributes {dimension_semantics = [#tpu.dimension_semantics<parallel>, #tpu.dimension_semantics<arbitrary>], iteration_bounds = array<i64: 1, 2>, scalar_prefetch = 0 : i64, scratch_operands = 1 : i64, tpu.core_type = #tpu.core_type<tc>, window_params = [{transform_indices = @transform_0, window_bounds = array<i64: 48, 256>}, {transform_indices = @transform_1, window_bounds = array<i64: 1, 256, 512>}, {transform_indices = @transform_2, window_bounds = array<i64: 256, 256>}, {transform_indices = @transform_3, window_bounds = array<i64: 1, 1, 512>}, {pipeline_mode = #tpu.pipeline_mode<synchronous>, transform_indices = @transform_4, window_bounds = array<i64: 1, 256>}, {transform_indices = @transform_5, window_bounds = array<i64: 48, 256>}]} {
    %c0_i32 = arith.constant 0 : i32
    %0 = arith.cmpi eq, %arg1, %c0_i32 : i32
    %1 = arith.extui %0 : i1 to i32
    %c0_i32_0 = arith.constant 0 : i32
    %2 = arith.cmpi ne, %1, %c0_i32_0 : i32
    scf.if %2 {
      %cst_17 = arith.constant 0.000000e+00 : f32
      %28 = vector.broadcast %cst_17 : f32 to vector<48x256xf32>
      %c0_18 = arith.constant 0 : index
      %c0_19 = arith.constant 0 : index
      %29 = vector.load %arg8[%c0_18, %c0_19] : memref<48x256xf32, #tpu.memory_space<vmem>>, vector<48x256xf32>
      tpu.vector_store %arg8[%c0_18, %c0_19], %28 {strides = array<i32>} : memref<48x256xf32, #tpu.memory_space<vmem>>, vector<48x256xf32>,
    } else {
    }
    %c0 = arith.constant 0 : index
    %c0_1 = arith.constant 0 : index
    %3 = vector.load %arg2[%c0, %c0_1] : memref<48x256xf32, #tpu.memory_space<vmem>>, vector<48x256xf32>
    %c0_2 = arith.constant 0 : index
    %c0_3 = arith.constant 0 : index
    %c0_4 = arith.constant 0 : index
    %4 = vector.load %arg3[%c0_2, %c0_3, %c0_4] : memref<1x256x512xf32, #tpu.memory_space<vmem>>, vector<1x256x512xf32>
    %5 = vector.shape_cast %4 : vector<1x256x512xf32> to vector<256x512xf32>
    %cst = arith.constant dense<0.000000e+00> : vector<48x512xf32>
    %6 = tpu.matmul %3, %5, %cst {dimension_numbers = #tpu.dot_dimension_numbers<[1], [0], [0], [1], [0, 0, 1, 1], [], []>} : vector<48x256xf32>, vector<256x512xf32>, vector<48x512xf32> -> vector<48x512xf32>
    %c0_5 = arith.constant 0 : index
    %c0_6 = arith.constant 0 : index
    %c0_7 = arith.constant 0 : index
    %7 = vector.load %arg5[%c0_5, %c0_6, %c0_7] : memref<1x1x512xf32, #tpu.memory_space<vmem>>, vector<1x1x512xf32>
    %8 = vector.shape_cast %7 : vector<1x1x512xf32> to vector<1x512xf32>
    %9 = vector.broadcast %8 : vector<1x512xf32> to vector<48x512xf32>
    %10 = arith.mulf %6, %9 : vector<48x512xf32>
    %11 = vector.extract_strided_slice %10 {offsets = [0, 0], sizes = [48, 256], strides = [1, 1]} : vector<48x512xf32> to vector<48x256xf32>
    %12 = vector.extract_strided_slice %10 {offsets = [0, 256], sizes = [48, 256], strides = [1, 1]} : vector<48x512xf32> to vector<48x256xf32>
    %13 = arith.negf %11 : vector<48x256xf32>
    %14 = math.exp %13 : vector<48x256xf32>
    %cst_8 = arith.constant 1.000000e+00 : f32
    %15 = vector.broadcast %cst_8 : f32 to vector<48x256xf32>
    %16 = arith.addf %15, %14 : vector<48x256xf32>
    %17 = arith.divf %15, %16 : vector<48x256xf32>
    %18 = arith.mulf %11, %17 : vector<48x256xf32>
    %19 = arith.mulf %18, %12 : vector<48x256xf32>
    %c0_9 = arith.constant 0 : index
    %c0_10 = arith.constant 0 : index
    %20 = vector.load %arg4[%c0_9, %c0_10] : memref<256x256xf32, #tpu.memory_space<vmem>>, vector<256x256xf32>
    %c0_11 = arith.constant 0 : index
    %c0_12 = arith.constant 0 : index
    %21 = vector.load %arg8[%c0_11, %c0_12] : memref<48x256xf32, #tpu.memory_space<vmem>>, vector<48x256xf32>
    %cst_13 = arith.constant dense<0.000000e+00> : vector<48x256xf32>
    %22 = tpu.matmul %19, %20, %cst_13 {dimension_numbers = #tpu.dot_dimension_numbers<[1], [0], [0], [1], [0, 0, 1, 1], [], []>} : vector<48x256xf32>, vector<256x256xf32>, vector<48x256xf32> -> vector<48x256xf32>
    %23 = arith.addf %21, %22 : vector<48x256xf32>
    %c0_14 = arith.constant 0 : index
    %c0_15 = arith.constant 0 : index
    %24 = vector.load %arg8[%c0_14, %c0_15] : memref<48x256xf32, #tpu.memory_space<vmem>>, vector<48x256xf32>
    tpu.vector_store %arg8[%c0_14, %c0_15], %23 {strides = array<i32>} : memref<48x256xf32, #tpu.memory_space<vmem>>, vector<48x256xf32>,
    %c1_i32 = arith.constant 1 : i32
    %25 = arith.cmpi eq, %arg1, %c1_i32 : i32
    %26 = arith.extui %25 : i1 to i32
    %c0_i32_16 = arith.constant 0 : i32
    %27 = arith.cmpi ne, %26, %c0_i32_16 : i32
    scf.if %27 {
      %c0_17 = arith.constant 0 : index
      %c0_18 = arith.constant 0 : index
      %28 = vector.load %arg8[%c0_17, %c0_18] : memref<48x256xf32, #tpu.memory_space<vmem>>, vector<48x256xf32>
      %c0_19 = arith.constant 0 : index
      %c0_20 = arith.constant 0 : index
      %29 = vector.load %arg6[%c0_19, %c0_20] : memref<1x256xf32, #tpu.memory_space<vmem>>, vector<1x256xf32>
      %30 = vector.broadcast %29 : vector<1x256xf32> to vector<48x256xf32>
      %31 = arith.mulf %28, %30 : vector<48x256xf32>
      %c0_21 = arith.constant 0 : index
      %c0_22 = arith.constant 0 : index
      %32 = vector.load %arg7[%c0_21, %c0_22] : memref<48x256xf32, #tpu.memory_space<vmem>>, vector<48x256xf32>
      tpu.vector_store %arg7[%c0_21, %c0_22], %31 {strides = array<i32>} : memref<48x256xf32, #tpu.memory_space<vmem>>, vector<48x256xf32>,
    } else {
    }
    return
  }
  func.func @transform_0(%arg0: i32, %arg1: i32) -> (i32, i32) {
    %c0_i32 = arith.constant 0 : i32
    %c0_i32_0 = arith.constant 0 : i32
    return %arg0, %c0_i32 : i32, i32
  }
  func.func @transform_1(%arg0: i32, %arg1: i32) -> (i32, i32, i32) {
    %c0_i32 = arith.constant 0 : i32
    %c0_i32_0 = arith.constant 0 : i32
    %c0_i32_1 = arith.constant 0 : i32
    return %arg1, %c0_i32, %c0_i32_0 : i32, i32, i32
  }
  func.func @transform_2(%arg0: i32, %arg1: i32) -> (i32, i32) {
    %c0_i32 = arith.constant 0 : i32
    %c0_i32_0 = arith.constant 0 : i32
    return %arg1, %c0_i32 : i32, i32
  }
  func.func @transform_3(%arg0: i32, %arg1: i32) -> (i32, i32, i32) {
    %c0_i32 = arith.constant 0 : i32
    %c0_i32_0 = arith.constant 0 : i32
    %c0_i32_1 = arith.constant 0 : i32
    return %arg1, %c0_i32, %c0_i32_0 : i32, i32, i32
  }
  func.func @transform_4(%arg0: i32, %arg1: i32) -> (i32, i32) {
    %c0_i32 = arith.constant 0 : i32
    %c0_i32_0 = arith.constant 0 : i32
    %c0_i32_1 = arith.constant 0 : i32
    return %c0_i32, %c0_i32_0 : i32, i32
  }
  func.func @transform_5(%arg0: i32, %arg1: i32) -> (i32, i32) {
    %c0_i32 = arith.constant 0 : i32
    %c0_i32_0 = arith.constant 0 : i32
    return %arg0, %c0_i32 : i32, i32
  }
}

</mosaic_0001>

<llo_original>
// kernel: qwen2_mlp_forward.1
$region0: #{qwen2_mlp_forward.1}
  #allocation0 [shape = 'u32[]', space=smem, size = 0x4, offset = 0x4, fixed_abs, tag = 'smem constant byte address 0x4 - core index']
  #allocation1 [shape = 'u32[144,128]{1,0:T(1,128)}', space=vmem, size = 0x12000, scoped, tag = 'internal scratch']
  #allocation2 [shape = 'f32[48,256]{1,0:T(8,128)}', space=vmem, size = 0xc000, scoped, tag = 'scratch operand']
  %s0 = inlined_call_operand.vmem [shape: f32[48,256], index: 0, kind: input, shape index: {}]
  %s1 = inlined_call_operand.hbm [shape: f32[2,256,512], index: 1, kind: input, shape index: {}]
  %s2 = inlined_call_operand.hbm [shape: f32[512,256], index: 2, kind: input, shape index: {}]
  %s3 = inlined_call_operand.vmem [shape: f32[2,1,512], index: 3, kind: input, shape index: {}]
  %s4 = inlined_call_operand.vmem [shape: f32[1,256], index: 4, kind: input, shape index: {}]
  %s5 = inlined_call_operand.vmem [shape: f32[48,256], index: 5, kind: output, shape index: {}]
  %s6 = sld [smem:[#allocation0]]
  $region69: #{qwen2_mlp_forward.1} parent=0
    _
  %s8 = ssub.s32 1, %s6
  %s9 = scalar_select 0, %s8, %s6
  $region1: #{qwen2_mlp_forward.1} parent=0
    #allocation3 [shape = 'u8[1048576]{0}', space=vmem, size = 0x100000, scoped, tag = 'input window, operand 1']
    #allocation4 [shape = 's32[2]{0}', space=sflag, size = 0x8, scoped, tag = 'scoped memory for qwen2_mlp_forward.1']
    #allocation5 [shape = 'u8[524288]{0}', space=vmem, size = 0x80000, scoped, tag = 'input window, operand 2']
    #allocation6 [shape = 's32[2]{0}', space=sflag, size = 0x8, scoped, tag = 'scoped memory for qwen2_mlp_forward.1']
    %10 = vsyncpa [#allocation4], 0
    %s11 = scalar_lea.sflag [#allocation4], 1
    %12 = vsyncpa %s11, 0
    %13 = vsyncpa [#allocation6], 0
    %s14 = scalar_lea.sflag [#allocation6], 1
    %15 = vsyncpa %s14, 0
    loop: start=0, step=1, limit=4
    $region2: #{qwen2_mlp_forward.1} parent=1 // loop_pre_header
      _
    $region3: #{qwen2_mlp_forward.1} parent=1 // loop_header
      %s17 = sphi 0, %s21
      %p18 = scmp.ge.s32.totalorder %s17, 4
      %s24 = sphi 0, %s36
      %s25 = sphi 0, %s32
      %s26 = sphi 0, %s24
      %s27 = sphi 0, %s25
      %s28 = sphi 0, %s26
      %s29 = sphi 0, %s27
      %s39 = sphi 0, %s41
      %s42 = sphi 0, %s39
      %s43 = sphi 0, %s42
      %s59 = sphi 0, %s43
      %s65 = sphi 0, %s67
      %s68 = sphi 0, %s65
      %s69 = sphi 0, %s68
      %s85 = sphi 0, %s69
      %s91 = sphi 0, %s93
      %s94 = sphi 0, %s91
      %s95 = sphi 0, %s94
      %s111 = sphi 0, %s95
      %s117 = sphi 0, %s119
      %s120 = sphi 0, %s117
      %s121 = sphi 0, %s120
      %s137 = sphi 0, %s121
      %s141 = sphi 0, %s141
      %s143 = sphi 0, %s141
      %s144 = sphi 0, %s143
      %s158 = sphi 0, %s144
      %s164 = sphi 0, %s166
      %s167 = sphi 0, %s164
      %s168 = sphi 0, %s167
      %s184 = sphi 0, %s168
    $region4: #{qwen2_mlp_forward.1} parent=1 // loop_header_branch
      %20 = sbr.rel (%p18) target = $region8
    $region5: #{qwen2_mlp_forward.1} parent=1 // loop_body
      %s22 = ssub.s32 %s17, 1
      %s23 = ssub.s32 %s17, 2
      %s30 = sadd.s32 1, %s25
      %p31 = scmp.ge.s32.totalorder %s30, 2
      %s32 = scalar_select %p31, 0, %s30
      %s33 = sadd.s32 1, %s24
      %s34 = scalar_select %p31, %s33, %s24
      %p35 = scmp.ge.s32.totalorder %s34, 1
      %s36 = scalar_select %p35, 0, %s34
      %s37 = ssub.s32 %s24, %s36
      %p38 = scmp.eq.s32.totalorder %s37, 0
      %s40 = sadd.s32 %s39, 1
      %s41 = scalar_select %p38, %s39, %s40
      %p44 = pneg %p38
      %p45 = scmp.eq.s32.totalorder %s17, 1
      %p46 = por %p44, %p45
      %p47 = scmp.ne.s32.totalorder %s39, %s42
      %p48 = scmp.eq.s32.totalorder %s17, 0
      %p49 = por %p47, %p48
      %p50 = scmp.ne.s32.totalorder %s39, %s42
      %p51 = scmp.eq.s32.totalorder %s22, 1
      %p52 = por %p50, %p51
      %p53 = scmp.ne.s32.totalorder %s42, %s43
      %p54 = scmp.eq.s32.totalorder %s22, 0
      %p55 = por %p53, %p54
      %p56 = scmp.ne.s32.totalorder %s42, %s43
      %p57 = scmp.eq.s32.totalorder %s23, 1
      %p58 = por %p56, %p57
      %p60 = scmp.ne.s32.totalorder %s43, %s59
      %p61 = scmp.eq.s32.totalorder %s23, 0
      %p62 = por %p60, %p61
      %s63 = ssub.s32 %s25, %s32
      %p64 = scmp.eq.s32.totalorder %s63, 0
      %s66 = sadd.s32 %s65, 1
      %s67 = scalar_select %p64, %s65, %s66
      %p70 = pneg %p64
      %p71 = scmp.eq.s32.totalorder %s17, 1
      %p72 = por %p70, %p71
      %p73 = scmp.ne.s32.totalorder %s65, %s68
      %p74 = scmp.eq.s32.totalorder %s17, 0
      %p75 = por %p73, %p74
      %p76 = scmp.ne.s32.totalorder %s65, %s68
      %p77 = scmp.eq.s32.totalorder %s22, 1
      %p78 = por %p76, %p77
      %p79 = scmp.ne.s32.totalorder %s68, %s69
      %p80 = scmp.eq.s32.totalorder %s22, 0
      %p81 = por %p79, %p80
      %p82 = scmp.ne.s32.totalorder %s68, %s69
      %p83 = scmp.eq.s32.totalorder %s23, 1
      %p84 = por %p82, %p83
      %p86 = scmp.ne.s32.totalorder %s69, %s85
      %p87 = scmp.eq.s32.totalorder %s23, 0
      %p88 = por %p86, %p87
      %s89 = ssub.s32 %s25, %s32
      %p90 = scmp.eq.s32.totalorder %s89, 0
      %s92 = sadd.s32 %s91, 1
      %s93 = scalar_select %p90, %s91, %s92
      %p96 = pneg %p90
      %p97 = scmp.eq.s32.totalorder %s17, 1
      %p98 = por %p96, %p97
      %p99 = scmp.ne.s32.totalorder %s91, %s94
      %p100 = scmp.eq.s32.totalorder %s17, 0
      %p101 = por %p99, %p100
      %p102 = scmp.ne.s32.totalorder %s91, %s94
      %p103 = scmp.eq.s32.totalorder %s22, 1
      %p104 = por %p102, %p103
      %p105 = scmp.ne.s32.totalorder %s94, %s95
      %p106 = scmp.eq.s32.totalorder %s22, 0
      %p107 = por %p105, %p106
      %p108 = scmp.ne.s32.totalorder %s94, %s95
      %p109 = scmp.eq.s32.totalorder %s23, 1
      %p110 = por %p108, %p109
      %p112 = scmp.ne.s32.totalorder %s95, %s111
      %p113 = scmp.eq.s32.totalorder %s23, 0
      %p114 = por %p112, %p113
      %s115 = ssub.s32 %s25, %s32
      %p116 = scmp.eq.s32.totalorder %s115, 0
      %s118 = sadd.s32 %s117, 1
      %s119 = scalar_select %p116, %s117, %s118
      %p122 = pneg %p116
      %p123 = scmp.eq.s32.totalorder %s17, 1
      %p124 = por %p122, %p123
      %p125 = scmp.ne.s32.totalorder %s117, %s120
      %p126 = scmp.eq.s32.totalorder %s17, 0
      %p127 = por %p125, %p126
      %p128 = scmp.ne.s32.totalorder %s117, %s120
      %p129 = scmp.eq.s32.totalorder %s22, 1
      %p130 = por %p128, %p129
      %p131 = scmp.ne.s32.totalorder %s120, %s121
      %p132 = scmp.eq.s32.totalorder %s22, 0
      %p133 = por %p131, %p132
      %p134 = scmp.ne.s32.totalorder %s120, %s121
      %p135 = scmp.eq.s32.totalorder %s23, 1
      %p136 = por %p134, %p135
      %p138 = scmp.ne.s32.totalorder %s121, %s137
      %p139 = scmp.eq.s32.totalorder %s23, 0
      %p140 = por %p138, %p139
      %s142 = sadd.s32 %s141, 1
      %p145 = scmp.eq.s32.totalorder %s17, 1
      %p146 = scmp.ne.s32.totalorder %s141, %s143
      %p147 = scmp.eq.s32.totalorder %s17, 0
      %p148 = por %p146, %p147
      %p149 = scmp.ne.s32.totalorder %s141, %s143
      %p150 = scmp.eq.s32.totalorder %s22, 1
      %p151 = por %p149, %p150
      %p152 = scmp.ne.s32.totalorder %s143, %s144
      %p153 = scmp.eq.s32.totalorder %s22, 0
      %p154 = por %p152, %p153
      %p155 = scmp.ne.s32.totalorder %s143, %s144
      %p156 = scmp.eq.s32.totalorder %s23, 1
      %p157 = por %p155, %p156
      %p159 = scmp.ne.s32.totalorder %s144, %s158
      %p160 = scmp.eq.s32.totalorder %s23, 0
      %p161 = por %p159, %p160
      %s162 = ssub.s32 %s24, %s36
      %p163 = scmp.eq.s32.totalorder %s162, 0
      %s165 = sadd.s32 %s164, 1
      %s166 = scalar_select %p163, %s164, %s165
      %p169 = pneg %p163
      %p170 = scmp.eq.s32.totalorder %s17, 1
      %p171 = por %p169, %p170
      %p172 = scmp.ne.s32.totalorder %s164, %s167
      %p173 = scmp.eq.s32.totalorder %s17, 0
      %p174 = por %p172, %p173
      %p175 = scmp.ne.s32.totalorder %s164, %s167
      %p176 = scmp.eq.s32.totalorder %s22, 1
      %p177 = por %p175, %p176
      %p178 = scmp.ne.s32.totalorder %s167, %s168
      %p179 = scmp.eq.s32.totalorder %s22, 0
      %p180 = por %p178, %p179
      %p181 = scmp.ne.s32.totalorder %s167, %s168
      %p182 = scmp.eq.s32.totalorder %s23, 1
      %p183 = por %p181, %p182
      %p185 = scmp.ne.s32.totalorder %s168, %s184
      %p186 = scmp.eq.s32.totalorder %s23, 0
      %p187 = por %p185, %p186
      %p188 = scmp.le.s32.totalorder 1, %s17
      %p189 = scmp.lt.s32.totalorder %s17, 3
      %p190 = pnand %p188, %p189
      %p191 = pneg %p190
      // Predicated region
      $region9: #{qwen2_mlp_forward.1} parent=5 // pred_check
        _
      $region10: #{qwen2_mlp_forward.1} parent=5 // pred_check_branch
        %193 = sbr.rel (%p190) target = $region12
      $region11: #{qwen2_mlp_forward.1} parent=5 // pred_region
        %s194 = ssub.s32 %s17, 1
        // Predicated region
        $region13: #{qwen2_mlp_forward.1} parent=11 // pred_check
          %p195 = pneg %p55
        $region14: #{qwen2_mlp_forward.1} parent=11 // pred_check_branch
          %197 = sbr.rel (%p195) target = $region16
        $region15: #{qwen2_mlp_forward.1} parent=11 // pred_region
          %s198 = smul.u32 6, %s26
          %p199 = scmp.lt.s32.totalorder %s198, 5
          %s200 = scalar_select %p199, %s198, 5
          %s201 = smul.addr %s200, 2
          %s202 = smul.addr %s201, 8
          %s203 = scalar_lea.vmem %s0, %s202
          %s204 = smul.u32 6, %s26
        $region16: #{qwen2_mlp_forward.1} parent=11 // pred_fallthru
          _
        // Predicated region
        $region17: #{qwen2_mlp_forward.1} parent=11 // pred_check
          %p205 = pneg %p154
        $region18: #{qwen2_mlp_forward.1} parent=11 // pred_check_branch
          %207 = sbr.rel (%p205) target = $region20
        $region19: #{qwen2_mlp_forward.1} parent=11 // pred_region
          _
        $region20: #{qwen2_mlp_forward.1} parent=11 // pred_fallthru
          _
      $region12: #{qwen2_mlp_forward.1} parent=5 // pred_fallthru
        _
      %p208 = scmp.lt.s32.totalorder %s17, 2
      // Predicated region
      $region21: #{qwen2_mlp_forward.1} parent=5 // pred_check
        %p209 = pneg %p208
      $region22: #{qwen2_mlp_forward.1} parent=5 // pred_check_branch
        %211 = sbr.rel (%p209) target = $region24
      $region23: #{qwen2_mlp_forward.1} parent=5 // pred_region
        // Predicated region
        $region25: #{qwen2_mlp_forward.1} parent=23 // pred_check
          %p212 = pneg %p75
        $region26: #{qwen2_mlp_forward.1} parent=23 // pred_check_branch
          %214 = sbr.rel (%p212) target = $region28
        $region27: #{qwen2_mlp_forward.1} parent=23 // pred_region
          %s215 = sand.u32 %s65, 1
          %s216 = scalar_lea.sflag [#allocation4], %s215
          %s217 = sand.u32 %s65, 1
          %s218 = smul.addr %s217, 1024
          %s219 = scalar_lea.vmem [#allocation3], %s218
          %s221 = ssub.s32 16384, 16384
          %222 = vsyncadd %s216, %s221
          %s223 = smul.addr %s25, 128
          %s224 = smul.addr %s223, 128
          %s225 = scalar_lea.hbm %s1, %s224
          %s226 = sshll.u32 %s219, 4
          %s227 = int_to_ptr.vmem [resolvable:$true] %s226
          %232 = dma.hbm_to_vmem [thread:$0]  %s225, 16384, %s227, %s216, 512, 512, 32
        $region28: #{qwen2_mlp_forward.1} parent=23 // pred_fallthru
          _
        // Predicated region
        $region29: #{qwen2_mlp_forward.1} parent=23 // pred_check
          %p233 = pneg %p101
        $region30: #{qwen2_mlp_forward.1} parent=23 // pred_check_branch
          %235 = sbr.rel (%p233) target = $region32
        $region31: #{qwen2_mlp_forward.1} parent=23 // pred_region
          %s236 = sand.u32 %s91, 1
          %s237 = scalar_lea.sflag [#allocation6], %s236
          %s238 = sand.u32 %s91, 1
          %s239 = smul.addr %s238, 512
          %s240 = scalar_lea.vmem [#allocation5], %s239
          %s241 = smul.u32 32, %s25
          %s243 = ssub.s32 8192, 8192
          %244 = vsyncadd %s237, %s243
          %s245 = smul.addr %s241, 2
          %s246 = smul.addr %s245, 128
          %s247 = scalar_lea.hbm %s2, %s246
          %s248 = sshll.u32 %s240, 4
          %s249 = int_to_ptr.vmem [resolvable:$true] %s248
          %254 = dma.hbm_to_vmem [thread:$0]  %s247, 8192, %s249, %s237, 256, 256, 16
        $region32: #{qwen2_mlp_forward.1} parent=23 // pred_fallthru
          _
        // Predicated region
        $region33: #{qwen2_mlp_forward.1} parent=23 // pred_check
          %p255 = pneg %p127
        $region34: #{qwen2_mlp_forward.1} parent=23 // pred_check_branch
          %257 = sbr.rel (%p255) target = $region36
        $region35: #{qwen2_mlp_forward.1} parent=23 // pred_region
          %p258 = scmp.lt.s32.totalorder %s25, 1
          %s259 = scalar_select %p258, %s25, 1
          %s260 = smul.addr %s259, 4
          %s261 = scalar_lea.vmem %s3, %s260
        $region36: #{qwen2_mlp_forward.1} parent=23 // pred_fallthru
          _
      $region24: #{qwen2_mlp_forward.1} parent=5 // pred_fallthru
        _
      %p262 = scmp.le.s32.totalorder 1, %s17
      %p263 = scmp.lt.s32.totalorder %s17, 3
      %p264 = pnand %p262, %p263
      %p265 = pneg %p264
      // Predicated region
      $region37: #{qwen2_mlp_forward.1} parent=5 // pred_check
        _
      $region38: #{qwen2_mlp_forward.1} parent=5 // pred_check_branch
        %267 = sbr.rel (%p264) target = $region40
      $region39: #{qwen2_mlp_forward.1} parent=5 // pred_region
        %s268 = ssub.s32 %s17, 1
        %s269 = sand.u32 %s68, 1
        %s270 = scalar_lea.sflag [#allocation4], %s269
        %s271 = sand.u32 %s68, 1
        %s272 = smul.addr %s271, 1024
        %s273 = scalar_lea.vmem [#allocation3], %s272
        // Predicated region
        $region41: #{qwen2_mlp_forward.1} parent=39 // pred_check
          %p274 = pneg %p81
        $region42: #{qwen2_mlp_forward.1} parent=39 // pred_check_branch
          %276 = sbr.rel (%p274) target = $region44
        $region43: #{qwen2_mlp_forward.1} parent=39 // pred_region
          %277 = dma.done %s270, 16384
        $region44: #{qwen2_mlp_forward.1} parent=39 // pred_fallthru
          _
        %s278 = sand.u32 %s94, 1
        %s279 = scalar_lea.sflag [#allocation6], %s278
        %s280 = sand.u32 %s94, 1
        %s281 = smul.addr %s280, 512
        %s282 = scalar_lea.vmem [#allocation5], %s281
        // Predicated region
        $region45: #{qwen2_mlp_forward.1} parent=39 // pred_check
          %p283 = pneg %p107
        $region46: #{qwen2_mlp_forward.1} parent=39 // pred_check_branch
          %285 = sbr.rel (%p283) target = $region48
        $region47: #{qwen2_mlp_forward.1} parent=39 // pred_region
          %286 = dma.done %s279, 8192
        $region48: #{qwen2_mlp_forward.1} parent=39 // pred_fallthru
          _
        %s287 = smul.u32 6, %s26
        %p288 = scmp.lt.s32.totalorder %s287, 5
        %s289 = scalar_select %p288, %s287, 5
        %s290 = smul.addr %s289, 2
        %s291 = smul.addr %s290, 8
        %s292 = scalar_lea.vmem %s0, %s291
        %p293 = pneg %p55
        %p294 = pneg %p52
        %s295 = sand.u32 %s68, 1
        %s296 = scalar_lea.sflag [#allocation4], %s295
        %s297 = sand.u32 %s68, 1
        %s298 = smul.addr %s297, 1024
        %s299 = scalar_lea.vmem [#allocation3], %s298
        %p300 = pneg %p81
        %p301 = pneg %p78
        %s302 = sand.u32 %s94, 1
        %s303 = scalar_lea.sflag [#allocation6], %s302
        %s304 = sand.u32 %s94, 1
        %s305 = smul.addr %s304, 512
        %s306 = scalar_lea.vmem [#allocation5], %s305
        %p307 = pneg %p107
        %p308 = pneg %p104
        %p309 = scmp.lt.s32.totalorder %s27, 1
        %s310 = scalar_select %p309, %s27, 1
        %s311 = smul.addr %s310, 4
        %s312 = scalar_lea.vmem %s3, %s311
        %p313 = pneg %p133
        %p314 = pneg %p130
        %p315 = pneg %p154
        %p316 = pneg %p151
        %p317 = pneg %p180
        %p318 = pneg %p177
        %s319 = smul.u32 6, %s26
        %p320 = scmp.lt.s32.totalorder %s319, 5
        %s321 = scalar_select %p320, %s319, 5
        %s322 = smul.addr %s321, 2
        %s323 = smul.addr %s322, 8
        %s324 = scalar_lea.vmem %s5, %s323
        %s325 = smul.u32 6, %s26
        %p326 = scmp.lt.s32.totalorder %s325, 5
        %s327 = scalar_select %p326, %s325, 5
        %s328 = smul.addr %s327, 2
        %s329 = smul.addr %s328, 8
        %s330 = scalar_lea.vmem %s0, %s329
        %s331 = smul.u32 6, %s26
        %s332 = smul.u32 32, %s27
        %p333 = scmp.lt.s32.totalorder %s27, 1
        %s334 = scalar_select %p333, %s27, 1
        %s335 = smul.addr %s334, 4
        %s336 = scalar_lea.vmem %s3, %s335
        %s337 = smul.u32 6, %s26
        %p338 = scmp.lt.s32.totalorder %s337, 5
        %s339 = scalar_select %p338, %s337, 5
        %s340 = smul.addr %s339, 2
        %s341 = smul.addr %s340, 8
        %s342 = scalar_lea.vmem %s5, %s341
        %s343 = smul.u32 6, %s26
        %p344 = scmp.eq.s32.totalorder %s27, 0
        // Predicated region
        $region49: #{qwen2_mlp_forward.1} parent=39 // pred_check
          %p345 = pneg %p344
        $region50: #{qwen2_mlp_forward.1} parent=39 // pred_check_branch
          %347 = sbr.rel (%p345) target = $region52
        $region51: #{qwen2_mlp_forward.1} parent=39 // pred_region
          %348 = vst [vmem:[#allocation2] sm:$0xff] 0.0
          %349 = vst [vmem:[#allocation2 + $0x8] sm:$0xff] 0.0
          %350 = vst [vmem:[#allocation2 + $0x10] sm:$0xff] 0.0
          %351 = vst [vmem:[#allocation2 + $0x18] sm:$0xff] 0.0
          %352 = vst [vmem:[#allocation2 + $0x20] sm:$0xff] 0.0
          %353 = vst [vmem:[#allocation2 + $0x28] sm:$0xff] 0.0
          %354 = vst [vmem:[#allocation2 + $0x30] sm:$0xff] 0.0
          %355 = vst [vmem:[#allocation2 + $0x38] sm:$0xff] 0.0
          %356 = vst [vmem:[#allocation2 + $0x40] sm:$0xff] 0.0
          %357 = vst [vmem:[#allocation2 + $0x48] sm:$0xff] 0.0
          %358 = vst [vmem:[#allocation2 + $0x50] sm:$0xff] 0.0
          %359 = vst [vmem:[#allocation2 + $0x58] sm:$0xff] 0.0
        $region52: #{qwen2_mlp_forward.1} parent=39 // pred_fallthru
          _
        %v360 = vld [vmem:[%s330] sm:$0xff]
        %v361 = vld [vmem:[%s330 + $0x8] sm:$0xff]
        %v362 = vld [vmem:[%s330 + $0x10] sm:$0xff]
        %v363 = vld [vmem:[%s330 + $0x18] sm:$0xff]
        %v364 = vld [vmem:[%s330 + $0x20] sm:$0xff]
        %v365 = vld [vmem:[%s330 + $0x28] sm:$0xff]
        %v366 = vld [vmem:[%s330 + $0x30] sm:$0xff]
        %v367 = vld [vmem:[%s330 + $0x38] sm:$0xff]
        %v368 = vld [vmem:[%s330 + $0x40] sm:$0xff]
        %v369 = vld [vmem:[%s330 + $0x48] sm:$0xff]
        %v370 = vld [vmem:[%s330 + $0x50] sm:$0xff]
        %v371 = vld [vmem:[%s330 + $0x58] sm:$0xff]
        %v372 = vld [vmem:[%s273] sm:$0xff]
        %v373 = vld [vmem:[%s273 + $0x8] sm:$0xff]
        %v374 = vld [vmem:[%s273 + $0x10] sm:$0xff]
        %v375 = vld [vmem:[%s273 + $0x18] sm:$0xff]
        %v376 = vld [vmem:[%s273 + $0x20] sm:$0xff]
        %v377 = vld [vmem:[%s273 + $0x28] sm:$0xff]
        %v378 = vld [vmem:[%s273 + $0x30] sm:$0xff]
        %v379 = vld [vmem:[%s273 + $0x38] sm:$0xff]
        %v380 = vld [vmem:[%s273 + $0x40] sm:$0xff]
        %v381 = vld [vmem:[%s273 + $0x48] sm:$0xff]
        %v382 = vld [vmem:[%s273 + $0x50] sm:$0xff]
        %v383 = vld [vmem:[%s273 + $0x58] sm:$0xff]
        %v384 = vld [vmem:[%s273 + $0x60] sm:$0xff]
        %v385 = vld [vmem:[%s273 + $0x68] sm:$0xff]
        %v386 = vld [vmem:[%s273 + $0x70] sm:$0xff]
        %v387 = vld [vmem:[%s273 + $0x78] sm:$0xff]
        %v388 = vld [vmem:[%s273 + $0x80] sm:$0xff]
        %v389 = vld [vmem:[%s273 + $0x88] sm:$0xff]
        %v390 = vld [vmem:[%s273 + $0x90] sm:$0xff]
        %v391 = vld [vmem:[%s273 + $0x98] sm:$0xff]
        %v392 = vld [vmem:[%s273 + $0xa0] sm:$0xff]
        %v393 = vld [vmem:[%s273 + $0xa8] sm:$0xff]
        %v394 = vld [vmem:[%s273 + $0xb0] sm:$0xff]
        %v395 = vld [vmem:[%s273 + $0xb8] sm:$0xff]
        %v396 = vld [vmem:[%s273 + $0xc0] sm:$0xff]
        %v397 = vld [vmem:[%s273 + $0xc8] sm:$0xff]
        %v398 = vld [vmem:[%s273 + $0xd0] sm:$0xff]
        %v399 = vld [vmem:[%s273 + $0xd8] sm:$0xff]
        %v400 = vld [vmem:[%s273 + $0xe0] sm:$0xff]
        %v401 = vld [vmem:[%s273 + $0xe8] sm:$0xff]
        %v402 = vld [vmem:[%s273 + $0xf0] sm:$0xff]
        %v403 = vld [vmem:[%s273 + $0xf8] sm:$0xff]
        %v404 = vld [vmem:[%s273 + $0x100] sm:$0xff]
        %v405 = vld [vmem:[%s273 + $0x108] sm:$0xff]
        %v406 = vld [vmem:[%s273 + $0x110] sm:$0xff]
        %v407 = vld [vmem:[%s273 + $0x118] sm:$0xff]
        %v408 = vld [vmem:[%s273 + $0x120] sm:$0xff]
        %v409 = vld [vmem:[%s273 + $0x128] sm:$0xff]
        %v410 = vld [vmem:[%s273 + $0x130] sm:$0xff]
        %v411 = vld [vmem:[%s273 + $0x138] sm:$0xff]
        %v412 = vld [vmem:[%s273 + $0x140] sm:$0xff]
        %v413 = vld [vmem:[%s273 + $0x148] sm:$0xff]
        %v414 = vld [vmem:[%s273 + $0x150] sm:$0xff]
        %v415 = vld [vmem:[%s273 + $0x158] sm:$0xff]
        %v416 = vld [vmem:[%s273 + $0x160] sm:$0xff]
        %v417 = vld [vmem:[%s273 + $0x168] sm:$0xff]
        %v418 = vld [vmem:[%s273 + $0x170] sm:$0xff]
        %v419 = vld [vmem:[%s273 + $0x178] sm:$0xff]
        %v420 = vld [vmem:[%s273 + $0x180] sm:$0xff]
        %v421 = vld [vmem:[%s273 + $0x188] sm:$0xff]
        %v422 = vld [vmem:[%s273 + $0x190] sm:$0xff]
        %v423 = vld [vmem:[%s273 + $0x198] sm:$0xff]
        %v424 = vld [vmem:[%s273 + $0x1a0] sm:$0xff]
        %v425 = vld [vmem:[%s273 + $0x1a8] sm:$0xff]
        %v426 = vld [vmem:[%s273 + $0x1b0] sm:$0xff]
        %v427 = vld [vmem:[%s273 + $0x1b8] sm:$0xff]
        %v428 = vld [vmem:[%s273 + $0x1c0] sm:$0xff]
        %v429 = vld [vmem:[%s273 + $0x1c8] sm:$0xff]
        %v430 = vld [vmem:[%s273 + $0x1d0] sm:$0xff]
        %v431 = vld [vmem:[%s273 + $0x1d8] sm:$0xff]
        %v432 = vld [vmem:[%s273 + $0x1e0] sm:$0xff]
        %v433 = vld [vmem:[%s273 + $0x1e8] sm:$0xff]
        %v434 = vld [vmem:[%s273 + $0x1f0] sm:$0xff]
        %v435 = vld [vmem:[%s273 + $0x1f8] sm:$0xff]
        %v436 = vld [vmem:[%s273 + $0x200] sm:$0xff]
        %v437 = vld [vmem:[%s273 + $0x208] sm:$0xff]
        %v438 = vld [vmem:[%s273 + $0x210] sm:$0xff]
        %v439 = vld [vmem:[%s273 + $0x218] sm:$0xff]
        %v440 = vld [vmem:[%s273 + $0x220] sm:$0xff]
        %v441 = vld [vmem:[%s273 + $0x228] sm:$0xff]
        %v442 = vld [vmem:[%s273 + $0x230] sm:$0xff]
        %v443 = vld [vmem:[%s273 + $0x238] sm:$0xff]
        %v444 = vld [vmem:[%s273 + $0x240] sm:$0xff]
        %v445 = vld [vmem:[%s273 + $0x248] sm:$0xff]
        %v446 = vld [vmem:[%s273 + $0x250] sm:$0xff]
        %v447 = vld [vmem:[%s273 + $0x258] sm:$0xff]
        %v448 = vld [vmem:[%s273 + $0x260] sm:$0xff]
        %v449 = vld [vmem:[%s273 + $0x268] sm:$0xff]
        %v450 = vld [vmem:[%s273 + $0x270] sm:$0xff]
        %v451 = vld [vmem:[%s273 + $0x278] sm:$0xff]
        %v452 = vld [vmem:[%s273 + $0x280] sm:$0xff]
        %v453 = vld [vmem:[%s273 + $0x288] sm:$0xff]
        %v454 = vld [vmem:[%s273 + $0x290] sm:$0xff]
        %v455 = vld [vmem:[%s273 + $0x298] sm:$0xff]
        %v456 = vld [vmem:[%s273 + $0x2a0] sm:$0xff]
        %v457 = vld [vmem:[%s273 + $0x2a8] sm:$0xff]
        %v458 = vld [vmem:[%s273 + $0x2b0] sm:$0xff]
        %v459 = vld [vmem:[%s273 + $0x2b8] sm:$0xff]
        %v460 = vld [vmem:[%s273 + $0x2c0] sm:$0xff]
        %v461 = vld [vmem:[%s273 + $0x2c8] sm:$0xff]
        %v462 = vld [vmem:[%s273 + $0x2d0] sm:$0xff]
        %v463 = vld [vmem:[%s273 + $0x2d8] sm:$0xff]
        %v464 = vld [vmem:[%s273 + $0x2e0] sm:$0xff]
        %v465 = vld [vmem:[%s273 + $0x2e8] sm:$0xff]
        %v466 = vld [vmem:[%s273 + $0x2f0] sm:$0xff]
        %v467 = vld [vmem:[%s273 + $0x2f8] sm:$0xff]
        %v468 = vld [vmem:[%s273 + $0x300] sm:$0xff]
        %v469 = vld [vmem:[%s273 + $0x308] sm:$0xff]
        %v470 = vld [vmem:[%s273 + $0x310] sm:$0xff]
        %v471 = vld [vmem:[%s273 + $0x318] sm:$0xff]
        %v472 = vld [vmem:[%s273 + $0x320] sm:$0xff]
        %v473 = vld [vmem:[%s273 + $0x328] sm:$0xff]
        %v474 = vld [vmem:[%s273 + $0x330] sm:$0xff]
        %v475 = vld [vmem:[%s273 + $0x338] sm:$0xff]
        %v476 = vld [vmem:[%s273 + $0x340] sm:$0xff]
        %v477 = vld [vmem:[%s273 + $0x348] sm:$0xff]
        %v478 = vld [vmem:[%s273 + $0x350] sm:$0xff]
        %v479 = vld [vmem:[%s273 + $0x358] sm:$0xff]
        %v480 = vld [vmem:[%s273 + $0x360] sm:$0xff]
        %v481 = vld [vmem:[%s273 + $0x368] sm:$0xff]
        %v482 = vld [vmem:[%s273 + $0x370] sm:$0xff]
        %v483 = vld [vmem:[%s273 + $0x378] sm:$0xff]
        %v484 = vld [vmem:[%s273 + $0x380] sm:$0xff]
        %v485 = vld [vmem:[%s273 + $0x388] sm:$0xff]
        %v486 = vld [vmem:[%s273 + $0x390] sm:$0xff]
        %v487 = vld [vmem:[%s273 + $0x398] sm:$0xff]
        %v488 = vld [vmem:[%s273 + $0x3a0] sm:$0xff]
        %v489 = vld [vmem:[%s273 + $0x3a8] sm:$0xff]
        %v490 = vld [vmem:[%s273 + $0x3b0] sm:$0xff]
        %v491 = vld [vmem:[%s273 + $0x3b8] sm:$0xff]
        %v492 = vld [vmem:[%s273 + $0x3c0] sm:$0xff]
        %v493 = vld [vmem:[%s273 + $0x3c8] sm:$0xff]
        %v494 = vld [vmem:[%s273 + $0x3d0] sm:$0xff]
        %v495 = vld [vmem:[%s273 + $0x3d8] sm:$0xff]
        %v496 = vld [vmem:[%s273 + $0x3e0] sm:$0xff]
        %v497 = vld [vmem:[%s273 + $0x3e8] sm:$0xff]
        %v498 = vld [vmem:[%s273 + $0x3f0] sm:$0xff]
        %v499 = vld [vmem:[%s273 + $0x3f8] sm:$0xff]
        %500 = vmatprep.subr.mxu0 %v373
        %501 = vmatpush1.msra.mxu0 %v372
        %502 = vmatprep.subr.mxu0 %v377
        %503 = vmatpush1.msra.mxu0 %v376
        %504 = vmatprep.subr.mxu0 %v381
        %505 = vmatpush1.msra.mxu0 %v380
        %506 = vmatprep.subr.mxu0 %v385
        %507 = vmatpush1.msra.mxu0 %v384
        %508 = vmatprep.subr.mxu0 %v389
        %509 = vmatpush1.msra.mxu0 %v388
        %510 = vmatprep.subr.mxu0 %v393
        %511 = vmatpush1.msra.mxu0 %v392
        %512 = vmatprep.subr.mxu0 %v397
        %513 = vmatpush1.msra.mxu0 %v396
        %514 = vmatprep.subr.mxu0 %v401
        %515 = vmatpush1.msra.mxu0 %v400
        %516 = vmatprep.subr.mxu0 %v405
        %517 = vmatpush1.msra.mxu0 %v404
        %518 = vmatprep.subr.mxu0 %v409
        %519 = vmatpush1.msra.mxu0 %v408
        %520 = vmatprep.subr.mxu0 %v413
        %521 = vmatpush1.msra.mxu0 %v412
        %522 = vmatprep.subr.mxu0 %v417
        %523 = vmatpush1.msra.mxu0 %v416
        %524 = vmatprep.subr.mxu0 %v421
        %525 = vmatpush1.msra.mxu0 %v420
        %526 = vmatprep.subr.mxu0 %v425
        %527 = vmatpush1.msra.mxu0 %v424
        %528 = vmatprep.subr.mxu0 %v429
        %529 = vmatpush1.msra.mxu0 %v428
        %530 = vmatprep.subr.mxu0 %v433
        %531 = vmatpush1.msra.mxu0 %v432
        %532 = vmatprep.subr.mxu0 %v437
        %533 = vmatpush1.msra.mxu0 %v436
        %534 = vmatprep.subr.mxu0 %v441
        %535 = vmatpush1.msra.mxu0 %v440
        %536 = vmatprep.subr.mxu0 %v445
        %537 = vmatpush1.msra.mxu0 %v444
        %538 = vmatprep.subr.mxu0 %v449
        %539 = vmatpush1.msra.mxu0 %v448
        %540 = vmatprep.subr.mxu0 %v453
        %541 = vmatpush1.msra.mxu0 %v452
        %542 = vmatprep.subr.mxu0 %v457
        %543 = vmatpush1.msra.mxu0 %v456
        %544 = vmatprep.subr.mxu0 %v461
        %545 = vmatpush1.msra.mxu0 %v460
        %546 = vmatprep.subr.mxu0 %v465
        %547 = vmatpush1.msra.mxu0 %v464
        %548 = vmatprep.subr.mxu0 %v469
        %549 = vmatpush1.msra.mxu0 %v468
        %550 = vmatprep.subr.mxu0 %v473
        %551 = vmatpush1.msra.mxu0 %v472
        %552 = vmatprep.subr.mxu0 %v477
        %553 = vmatpush1.msra.mxu0 %v476
        %554 = vmatprep.subr.mxu0 %v481
        %555 = vmatpush1.msra.mxu0 %v480
        %556 = vmatprep.subr.mxu0 %v485
        %557 = vmatpush1.msra.mxu0 %v484
        %558 = vmatprep.subr.mxu0 %v489
        %559 = vmatpush1.msra.mxu0 %v488
        %560 = vmatprep.subr.mxu0 %v493
        %561 = vmatpush1.msra.mxu0 %v492
        %562 = vmatprep.subr.mxu0 %v497
        %563 = vmatpush1.msra.mxu0 %v496
        %564 = vmatprep.mubr.f32.mxu0 %v361
        %565 = vmatmul.mubr.f32.gmra.mrb[0].mxu0 %v360
        %v566 = vpop.f32.mrb[0].mxu0
        %v567 = vadd.f32 0.0, %v566
        %v568 = vpop.f32.mrb[0].mxu0
        %v569 = vadd.f32 0.0, %v568
        %570 = vmatprep.mubr.f32.mxu0 %v363
        %571 = vmatmul.mubr.f32.gmra.mrb[0].mxu0 %v362
        %v572 = vpop.f32.mrb[0].mxu0
        %v573 = vadd.f32 0.0, %v572
        %v574 = vpop.f32.mrb[0].mxu0
        %v575 = vadd.f32 0.0, %v574
        %576 = vmatprep.mubr.f32.mxu0 %v365
        %577 = vmatmul.mubr.f32.gmra.mrb[0].mxu0 %v364
        %v578 = vpop.f32.mrb[0].mxu0
        %v579 = vadd.f32 0.0, %v578
        %v580 = vpop.f32.mrb[0].mxu0
        %v581 = vadd.f32 0.0, %v580
        %582 = vmatprep.mubr.f32.mxu0 %v367
        %583 = vmatmul.mubr.f32.gmra.mrb[0].mxu0 %v366
        %v584 = vpop.f32.mrb[0].mxu0
        %v585 = vadd.f32 0.0, %v584
        %v586 = vpop.f32.mrb[0].mxu0
        %v587 = vadd.f32 0.0, %v586
        %588 = vmatprep.mubr.f32.mxu0 %v369
        %589 = vmatmul.mubr.f32.gmra.mrb[0].mxu0 %v368
        %v590 = vpop.f32.mrb[0].mxu0
        %v591 = vadd.f32 0.0, %v590
        %v592 = vpop.f32.mrb[0].mxu0
        %v593 = vadd.f32 0.0, %v592
        %594 = vmatprep.mubr.f32.mxu0 %v371
        %595 = vmatmul.mubr.f32.gmra.mrb[0].mxu0 %v370
        %v596 = vpop.f32.mrb[0].mxu0
        %v597 = vadd.f32 0.0, %v596
        %v598 = vpop.f32.mrb[0].mxu0
        %v599 = vadd.f32 0.0, %v598
        %600 = vdwg.mxu0
        %601 = vmatprep.subr.mxu0 %v375
        %602 = vmatpush1.msra.mxu0 %v374
        %603 = vmatprep.subr.mxu0 %v379
        %604 = vmatpush1.msra.mxu0 %v378
        %605 = vmatprep.subr.mxu0 %v383
        %606 = vmatpush1.msra.mxu0 %v382
        %607 = vmatprep.subr.mxu0 %v387
        %608 = vmatpush1.msra.mxu0 %v386
        %609 = vmatprep.subr.mxu0 %v391
        %610 = vmatpush1.msra.mxu0 %v390
        %611 = vmatprep.subr.mxu0 %v395
        %612 = vmatpush1.msra.mxu0 %v394
        %613 = vmatprep.subr.mxu0 %v399
        %614 = vmatpush1.msra.mxu0 %v398
        %615 = vmatprep.subr.mxu0 %v403
        %616 = vmatpush1.msra.mxu0 %v402
        %617 = vmatprep.subr.mxu0 %v407
        %618 = vmatpush1.msra.mxu0 %v406
        %619 = vmatprep.subr.mxu0 %v411
        %620 = vmatpush1.msra.mxu0 %v410
        %621 = vmatprep.subr.mxu0 %v415
        %622 = vmatpush1.msra.mxu0 %v414
        %623 = vmatprep.subr.mxu0 %v419
        %624 = vmatpush1.msra.mxu0 %v418
        %625 = vmatprep.subr.mxu0 %v423
        %626 = vmatpush1.msra.mxu0 %v422
        %627 = vmatprep.subr.mxu0 %v427
        %628 = vmatpush1.msra.mxu0 %v426
        %629 = vmatprep.subr.mxu0 %v431
        %630 = vmatpush1.msra.mxu0 %v430
        %631 = vmatprep.subr.mxu0 %v435
        %632 = vmatpush1.msra.mxu0 %v434
        %633 = vmatprep.subr.mxu0 %v439
        %634 = vmatpush1.msra.mxu0 %v438
        %635 = vmatprep.subr.mxu0 %v443
        %636 = vmatpush1.msra.mxu0 %v442
        %637 = vmatprep.subr.mxu0 %v447
        %638 = vmatpush1.msra.mxu0 %v446
        %639 = vmatprep.subr.mxu0 %v451
        %640 = vmatpush1.msra.mxu0 %v450
        %641 = vmatprep.subr.mxu0 %v455
        %642 = vmatpush1.msra.mxu0 %v454
        %643 = vmatprep.subr.mxu0 %v459
        %644 = vmatpush1.msra.mxu0 %v458
        %645 = vmatprep.subr.mxu0 %v463
        %646 = vmatpush1.msra.mxu0 %v462
        %647 = vmatprep.subr.mxu0 %v467
        %648 = vmatpush1.msra.mxu0 %v466
        %649 = vmatprep.subr.mxu0 %v471
        %650 = vmatpush1.msra.mxu0 %v470
        %651 = vmatprep.subr.mxu0 %v475
        %652 = vmatpush1.msra.mxu0 %v474
        %653 = vmatprep.subr.mxu0 %v479
        %654 = vmatpush1.msra.mxu0 %v478
        %655 = vmatprep.subr.mxu0 %v483
        %656 = vmatpush1.msra.mxu0 %v482
        %657 = vmatprep.subr.mxu0 %v487
        %658 = vmatpush1.msra.mxu0 %v486
        %659 = vmatprep.subr.mxu0 %v491
        %660 = vmatpush1.msra.mxu0 %v490
        %661 = vmatprep.subr.mxu0 %v495
        %662 = vmatpush1.msra.mxu0 %v494
        %663 = vmatprep.subr.mxu0 %v499
        %664 = vmatpush1.msra.mxu0 %v498
        %665 = vmatprep.mubr.f32.mxu0 %v361
        %666 = vmatmul.mubr.f32.gmra.mrb[0].mxu0 %v360
        %v667 = vpop.f32.mrb[0].mxu0
        %v668 = vadd.f32 0.0, %v667
        %v669 = vpop.f32.mrb[0].mxu0
        %v670 = vadd.f32 0.0, %v669
        %671 = vmatprep.mubr.f32.mxu0 %v363
        %672 = vmatmul.mubr.f32.gmra.mrb[0].mxu0 %v362
        %v673 = vpop.f32.mrb[0].mxu0
        %v674 = vadd.f32 0.0, %v673
        %v675 = vpop.f32.mrb[0].mxu0
        %v676 = vadd.f32 0.0, %v675
        %677 = vmatprep.mubr.f32.mxu0 %v365
        %678 = vmatmul.mubr.f32.gmra.mrb[0].mxu0 %v364
        %v679 = vpop.f32.mrb[0].mxu0
        %v680 = vadd.f32 0.0, %v679
        %v681 = vpop.f32.mrb[0].mxu0
        %v682 = vadd.f32 0.0, %v681
        %683 = vmatprep.mubr.f32.mxu0 %v367
        %684 = vmatmul.mubr.f32.gmra.mrb[0].mxu0 %v366
        %v685 = vpop.f32.mrb[0].mxu0
        %v686 = vadd.f32 0.0, %v685
        %v687 = vpop.f32.mrb[0].mxu0
        %v688 = vadd.f32 0.0, %v687
        %689 = vmatprep.mubr.f32.mxu0 %v369
        %690 = vmatmul.mubr.f32.gmra.mrb[0].mxu0 %v368
        %v691 = vpop.f32.mrb[0].mxu0
        %v692 = vadd.f32 0.0, %v691
        %v693 = vpop.f32.mrb[0].mxu0
        %v694 = vadd.f32 0.0, %v693
        %695 = vmatprep.mubr.f32.mxu0 %v371
        %696 = vmatmul.mubr.f32.gmra.mrb[0].mxu0 %v370
        %v697 = vpop.f32.mrb[0].mxu0
        %v698 = vadd.f32 0.0, %v697
        %v699 = vpop.f32.mrb[0].mxu0
        %v700 = vadd.f32 0.0, %v699
        %701 = vdwg.mxu0
        %v702 = vld [vmem:[%s336] sm:$0xf]
        %v704 = vlaneseq
        %v705 = vshrl.u32 %v704, 7
        %v706 = vsub.s32 0, %v705
        %v707 = vrot.slane %v702, %v706
        %v708 = vlaneseq
        %v709 = vshrl.u32 %v708, 7
        %v710 = vsub.s32 1, %v709
        %v711 = vrot.slane %v702, %v710
        %v712 = vlaneseq
        %v713 = vshrl.u32 %v712, 7
        %v714 = vsub.s32 2, %v713
        %v715 = vrot.slane %v702, %v714
        %v716 = vlaneseq
        %v717 = vshrl.u32 %v716, 7
        %v718 = vsub.s32 3, %v717
        %v719 = vrot.slane %v702, %v718
        %v724 = vmul.f32 %v567, %v707
        %v725 = vmul.f32 %v569, %v711
        %v726 = vmul.f32 %v668, %v715
        %v727 = vmul.f32 %v670, %v719
        %v728 = vmul.f32 %v573, %v707
        %v729 = vmul.f32 %v575, %v711
        %v730 = vmul.f32 %v674, %v715
        %v731 = vmul.f32 %v676, %v719
        %v732 = vmul.f32 %v579, %v707
        %v733 = vmul.f32 %v581, %v711
        %v734 = vmul.f32 %v680, %v715
        %v735 = vmul.f32 %v682, %v719
        %v736 = vmul.f32 %v585, %v707
        %v737 = vmul.f32 %v587, %v711
        %v738 = vmul.f32 %v686, %v715
        %v739 = vmul.f32 %v688, %v719
        %v740 = vmul.f32 %v591, %v707
        %v741 = vmul.f32 %v593, %v711
        %v742 = vmul.f32 %v692, %v715
        %v743 = vmul.f32 %v694, %v719
        %v744 = vmul.f32 %v597, %v707
        %v745 = vmul.f32 %v599, %v711
        %v746 = vmul.f32 %v698, %v715
        %v747 = vmul.f32 %v700, %v719
        %v748 = vxor.u32 %v724, 2147483648
        %v749 = vxor.u32 %v725, 2147483648
        %v750 = vxor.u32 %v728, 2147483648
        %v751 = vxor.u32 %v729, 2147483648
        %v752 = vxor.u32 %v732, 2147483648
        %v753 = vxor.u32 %v733, 2147483648
        %v754 = vxor.u32 %v736, 2147483648
        %v755 = vxor.u32 %v737, 2147483648
        %v756 = vxor.u32 %v740, 2147483648
        %v757 = vxor.u32 %v741, 2147483648
        %v758 = vxor.u32 %v744, 2147483648
        %v759 = vxor.u32 %v745, 2147483648
        %v760 = vmul.f32 %v748, 1.442695
        %v761 = vpow.pop %v760
        %v762 = vmul.f32 %v749, 1.442695
        %v763 = vpow.pop %v762
        %v764 = vmul.f32 %v750, 1.442695
        %v765 = vpow.pop %v764
        %v766 = vmul.f32 %v751, 1.442695
        %v767 = vpow.pop %v766
        %v768 = vmul.f32 %v752, 1.442695
        %v769 = vpow.pop %v768
        %v770 = vmul.f32 %v753, 1.442695
        %v771 = vpow.pop %v770
        %v772 = vmul.f32 %v754, 1.442695
        %v773 = vpow.pop %v772
        %v774 = vmul.f32 %v755, 1.442695
        %v775 = vpow.pop %v774
        %v776 = vmul.f32 %v756, 1.442695
        %v777 = vpow.pop %v776
        %v778 = vmul.f32 %v757, 1.442695
        %v779 = vpow.pop %v778
        %v780 = vmul.f32 %v758, 1.442695
        %v781 = vpow.pop %v780
        %v782 = vmul.f32 %v759, 1.442695
        %v783 = vpow.pop %v782
        %v784 = vadd.f32 %v761, 1.0
        %v785 = vadd.f32 %v763, 1.0
        %v786 = vadd.f32 %v765, 1.0
        %v787 = vadd.f32 %v767, 1.0
        %v788 = vadd.f32 %v769, 1.0
        %v789 = vadd.f32 %v771, 1.0
        %v790 = vadd.f32 %v773, 1.0
        %v791 = vadd.f32 %v775, 1.0
        %v792 = vadd.f32 %v777, 1.0
        %v793 = vadd.f32 %v779, 1.0
        %v794 = vadd.f32 %v781, 1.0
        %v795 = vadd.f32 %v783, 1.0
        %v796 = vrcp.pop %v784
        %v797 = vmul.f32 1.0, %v796
        %v798 = vrcp.pop %v785
        %v799 = vmul.f32 1.0, %v798
        %v800 = vrcp.pop %v786
        %v801 = vmul.f32 1.0, %v800
        %v802 = vrcp.pop %v787
        %v803 = vmul.f32 1.0, %v802
        %v804 = vrcp.pop %v788
        %v805 = vmul.f32 1.0, %v804
        %v806 = vrcp.pop %v789
        %v807 = vmul.f32 1.0, %v806
        %v808 = vrcp.pop %v790
        %v809 = vmul.f32 1.0, %v808
        %v810 = vrcp.pop %v791
        %v811 = vmul.f32 1.0, %v810
        %v812 = vrcp.pop %v792
        %v813 = vmul.f32 1.0, %v812
        %v814 = vrcp.pop %v793
        %v815 = vmul.f32 1.0, %v814
        %v816 = vrcp.pop %v794
        %v817 = vmul.f32 1.0, %v816
        %v818 = vrcp.pop %v795
        %v819 = vmul.f32 1.0, %v818
        %v820 = vmul.f32 %v724, %v797
        %v821 = vmul.f32 %v725, %v799
        %v822 = vmul.f32 %v728, %v801
        %v823 = vmul.f32 %v729, %v803
        %v824 = vmul.f32 %v732, %v805
        %v825 = vmul.f32 %v733, %v807
        %v826 = vmul.f32 %v736, %v809
        %v827 = vmul.f32 %v737, %v811
        %v828 = vmul.f32 %v740, %v813
        %v829 = vmul.f32 %v741, %v815
        %v830 = vmul.f32 %v744, %v817
        %v831 = vmul.f32 %v745, %v819
        %v832 = vmul.f32 %v820, %v726
        %v833 = vmul.f32 %v821, %v727
        %v834 = vmul.f32 %v822, %v730
        %v835 = vmul.f32 %v823, %v731
        %v836 = vmul.f32 %v824, %v734
        %v837 = vmul.f32 %v825, %v735
        %v838 = vmul.f32 %v826, %v738
        %v839 = vmul.f32 %v827, %v739
        %v840 = vmul.f32 %v828, %v742
        %v841 = vmul.f32 %v829, %v743
        %v842 = vmul.f32 %v830, %v746
        %v843 = vmul.f32 %v831, %v747
        %v844 = vld [vmem:[%s282] sm:$0xff]
        %v845 = vld [vmem:[%s282 + $0x8] sm:$0xff]
        %v846 = vld [vmem:[%s282 + $0x10] sm:$0xff]
        %v847 = vld [vmem:[%s282 + $0x18] sm:$0xff]
        %v848 = vld [vmem:[%s282 + $0x20] sm:$0xff]
        %v849 = vld [vmem:[%s282 + $0x28] sm:$0xff]
        %v850 = vld [vmem:[%s282 + $0x30] sm:$0xff]
        %v851 = vld [vmem:[%s282 + $0x38] sm:$0xff]
        %v852 = vld [vmem:[%s282 + $0x40] sm:$0xff]
        %v853 = vld [vmem:[%s282 + $0x48] sm:$0xff]
        %v854 = vld [vmem:[%s282 + $0x50] sm:$0xff]
        %v855 = vld [vmem:[%s282 + $0x58] sm:$0xff]
        %v856 = vld [vmem:[%s282 + $0x60] sm:$0xff]
        %v857 = vld [vmem:[%s282 + $0x68] sm:$0xff]
        %v858 = vld [vmem:[%s282 + $0x70] sm:$0xff]
        %v859 = vld [vmem:[%s282 + $0x78] sm:$0xff]
        %v860 = vld [vmem:[%s282 + $0x80] sm:$0xff]
        %v861 = vld [vmem:[%s282 + $0x88] sm:$0xff]
        %v862 = vld [vmem:[%s282 + $0x90] sm:$0xff]
        %v863 = vld [vmem:[%s282 + $0x98] sm:$0xff]
        %v864 = vld [vmem:[%s282 + $0xa0] sm:$0xff]
        %v865 = vld [vmem:[%s282 + $0xa8] sm:$0xff]
        %v866 = vld [vmem:[%s282 + $0xb0] sm:$0xff]
        %v867 = vld [vmem:[%s282 + $0xb8] sm:$0xff]
        %v868 = vld [vmem:[%s282 + $0xc0] sm:$0xff]
        %v869 = vld [vmem:[%s282 + $0xc8] sm:$0xff]
        %v870 = vld [vmem:[%s282 + $0xd0] sm:$0xff]
        %v871 = vld [vmem:[%s282 + $0xd8] sm:$0xff]
        %v872 = vld [vmem:[%s282 + $0xe0] sm:$0xff]
        %v873 = vld [vmem:[%s282 + $0xe8] sm:$0xff]
        %v874 = vld [vmem:[%s282 + $0xf0] sm:$0xff]
        %v875 = vld [vmem:[%s282 + $0xf8] sm:$0xff]
        %v876 = vld [vmem:[%s282 + $0x100] sm:$0xff]
        %v877 = vld [vmem:[%s282 + $0x108] sm:$0xff]
        %v878 = vld [vmem:[%s282 + $0x110] sm:$0xff]
        %v879 = vld [vmem:[%s282 + $0x118] sm:$0xff]
        %v880 = vld [vmem:[%s282 + $0x120] sm:$0xff]
        %v881 = vld [vmem:[%s282 + $0x128] sm:$0xff]
        %v882 = vld [vmem:[%s282 + $0x130] sm:$0xff]
        %v883 = vld [vmem:[%s282 + $0x138] sm:$0xff]
        %v884 = vld [vmem:[%s282 + $0x140] sm:$0xff]
        %v885 = vld [vmem:[%s282 + $0x148] sm:$0xff]
        %v886 = vld [vmem:[%s282 + $0x150] sm:$0xff]
        %v887 = vld [vmem:[%s282 + $0x158] sm:$0xff]
        %v888 = vld [vmem:[%s282 + $0x160] sm:$0xff]
        %v889 = vld [vmem:[%s282 + $0x168] sm:$0xff]
        %v890 = vld [vmem:[%s282 + $0x170] sm:$0xff]
        %v891 = vld [vmem:[%s282 + $0x178] sm:$0xff]
        %v892 = vld [vmem:[%s282 + $0x180] sm:$0xff]
        %v893 = vld [vmem:[%s282 + $0x188] sm:$0xff]
        %v894 = vld [vmem:[%s282 + $0x190] sm:$0xff]
        %v895 = vld [vmem:[%s282 + $0x198] sm:$0xff]
        %v896 = vld [vmem:[%s282 + $0x1a0] sm:$0xff]
        %v897 = vld [vmem:[%s282 + $0x1a8] sm:$0xff]
        %v898 = vld [vmem:[%s282 + $0x1b0] sm:$0xff]
        %v899 = vld [vmem:[%s282 + $0x1b8] sm:$0xff]
        %v900 = vld [vmem:[%s282 + $0x1c0] sm:$0xff]
        %v901 = vld [vmem:[%s282 + $0x1c8] sm:$0xff]
        %v902 = vld [vmem:[%s282 + $0x1d0] sm:$0xff]
        %v903 = vld [vmem:[%s282 + $0x1d8] sm:$0xff]
        %v904 = vld [vmem:[%s282 + $0x1e0] sm:$0xff]
        %v905 = vld [vmem:[%s282 + $0x1e8] sm:$0xff]
        %v906 = vld [vmem:[%s282 + $0x1f0] sm:$0xff]
        %v907 = vld [vmem:[%s282 + $0x1f8] sm:$0xff]
        %v908 = vld [vmem:[#allocation2] sm:$0xff]
        %v909 = vld [vmem:[#allocation2 + $0x8] sm:$0xff]
        %v910 = vld [vmem:[#allocation2 + $0x10] sm:$0xff]
        %v911 = vld [vmem:[#allocation2 + $0x18] sm:$0xff]
        %v912 = vld [vmem:[#allocation2 + $0x20] sm:$0xff]
        %v913 = vld [vmem:[#allocation2 + $0x28] sm:$0xff]
        %v914 = vld [vmem:[#allocation2 + $0x30] sm:$0xff]
        %v915 = vld [vmem:[#allocation2 + $0x38] sm:$0xff]
        %v916 = vld [vmem:[#allocation2 + $0x40] sm:$0xff]
        %v917 = vld [vmem:[#allocation2 + $0x48] sm:$0xff]
        %v918 = vld [vmem:[#allocation2 + $0x50] sm:$0xff]
        %v919 = vld [vmem:[#allocation2 + $0x58] sm:$0xff]
        %920 = vmatprep.subr.mxu0 %v845
        %921 = vmatpush1.msra.mxu0 %v844
        %922 = vmatprep.subr.mxu0 %v847
        %923 = vmatpush1.msra.mxu0 %v846
        %924 = vmatprep.subr.mxu0 %v849
        %925 = vmatpush1.msra.mxu0 %v848
        %926 = vmatprep.subr.mxu0 %v851
        %927 = vmatpush1.msra.mxu0 %v850
        %928 = vmatprep.subr.mxu0 %v853
        %929 = vmatpush1.msra.mxu0 %v852
        %930 = vmatprep.subr.mxu0 %v855
        %931 = vmatpush1.msra.mxu0 %v854
        %932 = vmatprep.subr.mxu0 %v857
        %933 = vmatpush1.msra.mxu0 %v856
        %934 = vmatprep.subr.mxu0 %v859
        %935 = vmatpush1.msra.mxu0 %v858
        %936 = vmatprep.subr.mxu0 %v861
        %937 = vmatpush1.msra.mxu0 %v860
        %938 = vmatprep.subr.mxu0 %v863
        %939 = vmatpush1.msra.mxu0 %v862
        %940 = vmatprep.subr.mxu0 %v865
        %941 = vmatpush1.msra.mxu0 %v864
        %942 = vmatprep.subr.mxu0 %v867
        %943 = vmatpush1.msra.mxu0 %v866
        %944 = vmatprep.subr.mxu0 %v869
        %945 = vmatpush1.msra.mxu0 %v868
        %946 = vmatprep.subr.mxu0 %v871
        %947 = vmatpush1.msra.mxu0 %v870
        %948 = vmatprep.subr.mxu0 %v873
        %949 = vmatpush1.msra.mxu0 %v872
        %950 = vmatprep.subr.mxu0 %v875
        %951 = vmatpush1.msra.mxu0 %v874
        %952 = vmatprep.subr.mxu0 %v877
        %953 = vmatpush1.msra.mxu0 %v876
        %954 = vmatprep.subr.mxu0 %v879
        %955 = vmatpush1.msra.mxu0 %v878
        %956 = vmatprep.subr.mxu0 %v881
        %957 = vmatpush1.msra.mxu0 %v880
        %958 = vmatprep.subr.mxu0 %v883
        %959 = vmatpush1.msra.mxu0 %v882
        %960 = vmatprep.subr.mxu0 %v885
        %961 = vmatpush1.msra.mxu0 %v884
        %962 = vmatprep.subr.mxu0 %v887
        %963 = vmatpush1.msra.mxu0 %v886
        %964 = vmatprep.subr.mxu0 %v889
        %965 = vmatpush1.msra.mxu0 %v888
        %966 = vmatprep.subr.mxu0 %v891
        %967 = vmatpush1.msra.mxu0 %v890
        %968 = vmatprep.subr.mxu0 %v893
        %969 = vmatpush1.msra.mxu0 %v892
        %970 = vmatprep.subr.mxu0 %v895
        %971 = vmatpush1.msra.mxu0 %v894
        %972 = vmatprep.subr.mxu0 %v897
        %973 = vmatpush1.msra.mxu0 %v896
        %974 = vmatprep.subr.mxu0 %v899
        %975 = vmatpush1.msra.mxu0 %v898
        %976 = vmatprep.subr.mxu0 %v901
        %977 = vmatpush1.msra.mxu0 %v900
        %978 = vmatprep.subr.mxu0 %v903
        %979 = vmatpush1.msra.mxu0 %v902
        %980 = vmatprep.subr.mxu0 %v905
        %981 = vmatpush1.msra.mxu0 %v904
        %982 = vmatprep.subr.mxu0 %v907
        %983 = vmatpush1.msra.mxu0 %v906
        %984 = vmatprep.mubr.f32.mxu0 %v833
        %985 = vmatmul.mubr.f32.gmra.mrb[0].mxu0 %v832
        %v986 = vpop.f32.mrb[0].mxu0
        %v987 = vadd.f32 0.0, %v986
        %v988 = vpop.f32.mrb[0].mxu0
        %v989 = vadd.f32 0.0, %v988
        %990 = vmatprep.mubr.f32.mxu0 %v835
        %991 = vmatmul.mubr.f32.gmra.mrb[0].mxu0 %v834
        %v992 = vpop.f32.mrb[0].mxu0
        %v993 = vadd.f32 0.0, %v992
        %v994 = vpop.f32.mrb[0].mxu0
        %v995 = vadd.f32 0.0, %v994
        %996 = vmatprep.mubr.f32.mxu0 %v837
        %997 = vmatmul.mubr.f32.gmra.mrb[0].mxu0 %v836
        %v998 = vpop.f32.mrb[0].mxu0
        %v999 = vadd.f32 0.0, %v998
        %v1000 = vpop.f32.mrb[0].mxu0
        %v1001 = vadd.f32 0.0, %v1000
        %1002 = vmatprep.mubr.f32.mxu0 %v839
        %1003 = vmatmul.mubr.f32.gmra.mrb[0].mxu0 %v838
        %v1004 = vpop.f32.mrb[0].mxu0
        %v1005 = vadd.f32 0.0, %v1004
        %v1006 = vpop.f32.mrb[0].mxu0
        %v1007 = vadd.f32 0.0, %v1006
        %1008 = vmatprep.mubr.f32.mxu0 %v841
        %1009 = vmatmul.mubr.f32.gmra.mrb[0].mxu0 %v840
        %v1010 = vpop.f32.mrb[0].mxu0
        %v1011 = vadd.f32 0.0, %v1010
        %v1012 = vpop.f32.mrb[0].mxu0
        %v1013 = vadd.f32 0.0, %v1012
        %1014 = vmatprep.mubr.f32.mxu0 %v843
        %1015 = vmatmul.mubr.f32.gmra.mrb[0].mxu0 %v842
        %v1016 = vpop.f32.mrb[0].mxu0
        %v1017 = vadd.f32 0.0, %v1016
        %v1018 = vpop.f32.mrb[0].mxu0
        %v1019 = vadd.f32 0.0, %v1018
        %1020 = vdwg.mxu0
        %v1021 = vadd.f32 %v908, %v987
        %v1022 = vadd.f32 %v909, %v989
        %v1023 = vadd.f32 %v910, %v993
        %v1024 = vadd.f32 %v911, %v995
        %v1025 = vadd.f32 %v912, %v999
        %v1026 = vadd.f32 %v913, %v1001
        %v1027 = vadd.f32 %v914, %v1005
        %v1028 = vadd.f32 %v915, %v1007
        %v1029 = vadd.f32 %v916, %v1011
        %v1030 = vadd.f32 %v917, %v1013
        %v1031 = vadd.f32 %v918, %v1017
        %v1032 = vadd.f32 %v919, %v1019
        %1033 = vst [vmem:[#allocation2] sm:$0xff] %v1021
        %1034 = vst [vmem:[#allocation2 + $0x8] sm:$0xff] %v1022
        %1035 = vst [vmem:[#allocation2 + $0x10] sm:$0xff] %v1023
        %1036 = vst [vmem:[#allocation2 + $0x18] sm:$0xff] %v1024
        %1037 = vst [vmem:[#allocation2 + $0x20] sm:$0xff] %v1025
        %1038 = vst [vmem:[#allocation2 + $0x28] sm:$0xff] %v1026
        %1039 = vst [vmem:[#allocation2 + $0x30] sm:$0xff] %v1027
        %1040 = vst [vmem:[#allocation2 + $0x38] sm:$0xff] %v1028
        %1041 = vst [vmem:[#allocation2 + $0x40] sm:$0xff] %v1029
        %1042 = vst [vmem:[#allocation2 + $0x48] sm:$0xff] %v1030
        %1043 = vst [vmem:[#allocation2 + $0x50] sm:$0xff] %v1031
        %1044 = vst [vmem:[#allocation2 + $0x58] sm:$0xff] %v1032
        %p1045 = scmp.eq.s32.totalorder %s27, 1
        // Predicated region
        $region53: #{qwen2_mlp_forward.1} parent=39 // pred_check
          %p1046 = pneg %p1045
        $region54: #{qwen2_mlp_forward.1} parent=39 // pred_check_branch
          %1048 = sbr.rel (%p1046) target = $region56
        $region55: #{qwen2_mlp_forward.1} parent=39 // pred_region
          %v1049 = vld [vmem:[#allocation2] sm:$0xff]
          %v1050 = vld [vmem:[#allocation2 + $0x8] sm:$0xff]
          %v1051 = vld [vmem:[#allocation2 + $0x10] sm:$0xff]
          %v1052 = vld [vmem:[#allocation2 + $0x18] sm:$0xff]
          %v1053 = vld [vmem:[#allocation2 + $0x20] sm:$0xff]
          %v1054 = vld [vmem:[#allocation2 + $0x28] sm:$0xff]
          %v1055 = vld [vmem:[#allocation2 + $0x30] sm:$0xff]
          %v1056 = vld [vmem:[#allocation2 + $0x38] sm:$0xff]
          %v1057 = vld [vmem:[#allocation2 + $0x40] sm:$0xff]
          %v1058 = vld [vmem:[#allocation2 + $0x48] sm:$0xff]
          %v1059 = vld [vmem:[#allocation2 + $0x50] sm:$0xff]
          %v1060 = vld [vmem:[#allocation2 + $0x58] sm:$0xff]
          %v1061 = vld [vmem:[%s4] sm:$0x3]
          %v1063 = vlaneseq
          %v1064 = vshrl.u32 %v1063, 7
          %v1065 = vsub.s32 0, %v1064
          %v1066 = vrot.slane %v1061, %v1065
          %v1067 = vlaneseq
          %v1068 = vshrl.u32 %v1067, 7
          %v1069 = vsub.s32 1, %v1068
          %v1070 = vrot.slane %v1061, %v1069
          %v1073 = vmul.f32 %v1049, %v1066
          %v1074 = vmul.f32 %v1050, %v1070
          %v1075 = vmul.f32 %v1051, %v1066
          %v1076 = vmul.f32 %v1052, %v1070
          %v1077 = vmul.f32 %v1053, %v1066
          %v1078 = vmul.f32 %v1054, %v1070
          %v1079 = vmul.f32 %v1055, %v1066
          %v1080 = vmul.f32 %v1056, %v1070
          %v1081 = vmul.f32 %v1057, %v1066
          %v1082 = vmul.f32 %v1058, %v1070
          %v1083 = vmul.f32 %v1059, %v1066
          %v1084 = vmul.f32 %v1060, %v1070
          %1085 = vst [vmem:[%s342] sm:$0xff] %v1073
          %1086 = vst [vmem:[%s342 + $0x8] sm:$0xff] %v1074
          %1087 = vst [vmem:[%s342 + $0x10] sm:$0xff] %v1075
          %1088 = vst [vmem:[%s342 + $0x18] sm:$0xff] %v1076
          %1089 = vst [vmem:[%s342 + $0x20] sm:$0xff] %v1077
          %1090 = vst [vmem:[%s342 + $0x28] sm:$0xff] %v1078
          %1091 = vst [vmem:[%s342 + $0x30] sm:$0xff] %v1079
          %1092 = vst [vmem:[%s342 + $0x38] sm:$0xff] %v1080
          %1093 = vst [vmem:[%s342 + $0x40] sm:$0xff] %v1081
          %1094 = vst [vmem:[%s342 + $0x48] sm:$0xff] %v1082
          %1095 = vst [vmem:[%s342 + $0x50] sm:$0xff] %v1083
          %1096 = vst [vmem:[%s342 + $0x58] sm:$0xff] %v1084
        $region56: #{qwen2_mlp_forward.1} parent=39 // pred_fallthru
          _
        %s1097 = smul.u32 6, %s26
        %p1098 = scmp.lt.s32.totalorder %s1097, 5
        %s1099 = scalar_select %p1098, %s1097, 5
        %s1100 = smul.addr %s1099, 2
        %s1101 = smul.addr %s1100, 8
        %s1102 = scalar_lea.vmem %s5, %s1101
        // Predicated region
        $region57: #{qwen2_mlp_forward.1} parent=39 // pred_check
          %p1103 = pneg %p177
        $region58: #{qwen2_mlp_forward.1} parent=39 // pred_check_branch
          %1105 = sbr.rel (%p1103) target = $region60
        $region59: #{qwen2_mlp_forward.1} parent=39 // pred_region
          %s1106 = smul.u32 6, %s26
        $region60: #{qwen2_mlp_forward.1} parent=39 // pred_fallthru
          _
        // Predicated region
        $region61: #{qwen2_mlp_forward.1} parent=39 // pred_check
          %p1107 = pneg %p177
        $region62: #{qwen2_mlp_forward.1} parent=39 // pred_check_branch
          %1109 = sbr.rel (%p1107) target = $region64
        $region63: #{qwen2_mlp_forward.1} parent=39 // pred_region
          %s1110 = smul.u32 6, %s26
          %p1111 = scmp.lt.s32.totalorder %s1110, 5
          %s1112 = scalar_select %p1111, %s1110, 5
          %s1113 = smul.addr %s1112, 2
          %s1114 = smul.addr %s1113, 8
          %s1115 = scalar_lea.vmem %s5, %s1114
        $region64: #{qwen2_mlp_forward.1} parent=39 // pred_fallthru
          _
      $region40: #{qwen2_mlp_forward.1} parent=5 // pred_fallthru
        _
      %p1116 = scmp.le.s32.totalorder 2, %s17
      // Predicated region
      $region65: #{qwen2_mlp_forward.1} parent=5 // pred_check
        %p1117 = pneg %p1116
      $region66: #{qwen2_mlp_forward.1} parent=5 // pred_check_branch
        %1119 = sbr.rel (%p1117) target = $region68
      $region67: #{qwen2_mlp_forward.1} parent=5 // pred_region
        %s1120 = ssub.s32 %s17, 2
      $region68: #{qwen2_mlp_forward.1} parent=5 // pred_fallthru
        _
    $region6: #{qwen2_mlp_forward.1} parent=1 // loop_footer
      %s21 = sadd.s32 1, %s17
    $region7: #{qwen2_mlp_forward.1} parent=1 // loop_footer_branch
      %16 = sbr.rel target = $region3
    $region8: #{qwen2_mlp_forward.1} parent=1 // loop_exit
      _
    %1121 = vsyncpa [#allocation4], 1
    %s1122 = scalar_lea.sflag [#allocation4], 1
    %1123 = vsyncpa %s1122, 1
    %1124 = vsyncpa [#allocation6], 1
    %s1125 = scalar_lea.sflag [#allocation6], 1
    %1126 = vsyncpa %s1125, 1

</llo_original>
